<compile_context>
chip_gen: v7x
topology: tpu7x:2x2x1
jax: 0.10.0
libtpu: 0.0.40
codegen_flags: <defaults>
</compile_context>

<pallas_src>
import functools

import jax
import jax.numpy as jnp
from jax.experimental import pallas as pl
from jax.experimental.pallas import tpu as pltpu


def _cce_kernel(pred_ref, label_ref, out_ref, acc_ref, *,
                n_total, tile_n, tiles_per_part):
    # pred_ref:  (tile_n, C)  native dtype, VMEM
    # label_ref: (tile_n, 1)  int32, VMEM
    # out_ref:   (8, 128)     f32 partial-sum block for this batch shard
    # acc_ref:   (1, 1)       f32 running sum (persists across the tile axis)
    p = pl.program_id(0)          # batch shard (parallel; a TC on v7x)
    i = pl.program_id(1)          # row tile within the shard (reduction axis)

    @pl.when(i == 0)
    def _init():
        acc_ref[...] = jnp.zeros_like(acc_ref)

    # Stream native dtype from HBM, upcast once in VMEM (f32 math everywhere).
    pred = pred_ref[...].astype(jnp.float32)                  # (tile_n, C)
    labels = label_ref[...]                                   # (tile_n, 1)

    # Select the target-class probability per row (one match per row), then
    # clamp + log only the (tile_n, 1) column: C-fold fewer EUP ops.
    col_idx = jax.lax.broadcasted_iota(jnp.int32, pred.shape, dimension=1)
    sel = jnp.sum(jnp.where(col_idx == labels, pred, 0.0),
                  axis=1, keepdims=True)                      # (tile_n, 1)
    # clamp(y_pred, 1e-9, 1.0) commutes with the one-hot selection.
    sel = jnp.clip(sel, 1e-9, 1.0)

    # Mask rows beyond the true batch size (partial last tile / padded tiles).
    tile_idx = p * tiles_per_part + i
    row = jax.lax.broadcasted_iota(jnp.int32, sel.shape, 0) + tile_idx * tile_n
    per_row = jnp.where(row < n_total, -jnp.log(sel), 0.0)    # (tile_n, 1)

    acc_ref[...] += jnp.sum(per_row, axis=0, keepdims=True)   # (1, 1)

    @pl.when(i == pl.num_programs(1) - 1)
    def _finalize():
        # Lane-dense (8,128) block, every element holds this shard's sum.
        out_ref[...] = jnp.broadcast_to(acc_ref[...], out_ref.shape)


def categorical_cross_entropy_loss(y_pred, y_true, *, tile_n=None, num_parts=2):
    """loss = mean_n( -log(clip(y_pred, 1e-9, 1)[n, y_true[n]]) )."""
    n, c = y_pred.shape
    labels = y_true.reshape(n, 1).astype(jnp.int32)

    if tile_n is None:
        # ~4 MiB per row-tile buffer (double-buffered by the BlockSpec pipeline),
        # safe under every generation's scoped-VMEM default.
        bytes_per_row = c * jnp.dtype(y_pred.dtype).itemsize
        tile_n = max(8, min(1024, (4 * 1024 * 1024) // max(1, bytes_per_row)))
    if tile_n >= n:
        tile_n = n                       # full extent is always a legal block dim
    else:
        tile_n = max(8, tile_n - tile_n % 8)   # keep the sublane dim 8-aligned

    num_tiles = pl.cdiv(n, tile_n)
    num_parts = max(1, min(num_parts, num_tiles))
    tiles_per_part = pl.cdiv(num_tiles, num_parts)

    def tile_map(p, i):
        # Clamp so padded tiles (when num_tiles % num_parts != 0) stay in
        # bounds; their rows are masked out inside the kernel.
        return (jnp.minimum(p * tiles_per_part + i, num_tiles - 1), 0)

    kernel = functools.partial(
        _cce_kernel, n_total=n, tile_n=tile_n, tiles_per_part=tiles_per_part)

    out = pl.pallas_call(
        kernel,
        out_shape=jax.ShapeDtypeStruct((num_parts * 8, 128), jnp.float32),
        grid_spec=pltpu.PrefetchScalarGridSpec(
            num_scalar_prefetch=0,
            grid=(num_parts, tiles_per_part),
            in_specs=[
                pl.BlockSpec((tile_n, c), tile_map),   # pred, native dtype
                pl.BlockSpec((tile_n, 1), tile_map),   # labels
            ],
            out_specs=pl.BlockSpec((8, 128), lambda p, i: (p, 0)),
            scratch_shapes=[pltpu.VMEM((1, 1), jnp.float32)],
        ),
        compiler_params=pltpu.CompilerParams(
            dimension_semantics=("parallel", "arbitrary")),
    )(y_pred, labels)

    partial_sums = out.reshape(num_parts, 8, 128)[:, 0, 0]    # one scalar/shard
    return jnp.sum(partial_sums) / jnp.float32(n)


def _reference(y_pred, y_true):
    # Pure-JAX mirror of the PyTorch module.
    c = y_pred.shape[1]
    one_hot = jax.nn.one_hot(y_true, c, dtype=y_pred.dtype)
    clamped = jnp.clip(y_pred, 1e-9, 1.0)
    tol_loss = -jnp.sum(one_hot * jnp.log(clamped), axis=1)
    return jnp.mean(tol_loss, axis=0)


if __name__ == "__main__":
    key = jax.random.PRNGKey(0)
    k1, k2, k3, k4 = jax.random.split(key, 4)

    # Case 1: tiny single-tile problem (batch=8, classes=32).
    n1, c1 = 8, 32
    y_pred1 = jax.nn.softmax(jax.random.normal(k1, (n1, c1), jnp.float32), axis=1)
    y_true1 = jax.random.randint(k2, (n1,), 0, c1, dtype=jnp.int32)
    loss1 = jax.block_until_ready(categorical_cross_entropy_loss(y_pred1, y_true1))
    ref1 = _reference(y_pred1, y_true1)
    assert jnp.allclose(loss1, ref1, atol=1e-5, rtol=1e-5), (loss1, ref1)

    # Case 2: exercises the multi-tile grid, 2-way batch split and the
    # partial/padded-tile masking path (50 rows, 8-row tiles, 2 shards).
    n2, c2 = 50, 40
    y_pred2 = jax.nn.softmax(jax.random.normal(k3, (n2, c2), jnp.float32), axis=1)
    y_true2 = jax.random.randint(k4, (n2,), 0, c2, dtype=jnp.int32)
    loss2 = jax.block_until_ready(
        categorical_cross_entropy_loss(y_pred2, y_true2, tile_n=8, num_parts=2))
    ref2 = _reference(y_pred2, y_true2)
    assert jnp.allclose(loss2, ref2, atol=1e-5, rtol=1e-5), (loss2, ref2)

    print("KERNEL_OK")
</pallas_src>

<mosaic_0001>
module attributes {stable_mosaic.version = 11 : i64} {
  func.func @_cce_kernel(%arg0: i32, %arg1: i32, %arg2: memref<8x32xf32, #tpu.memory_space<vmem>>, %arg3: memref<8x1xi32, #tpu.memory_space<vmem>>, %arg4: memref<8x128xf32, #tpu.memory_space<vmem>>, %arg5: memref<1x1xf32, #tpu.memory_space<vmem>>) attributes {dimension_semantics = [#tpu.dimension_semantics<parallel>, #tpu.dimension_semantics<arbitrary>], iteration_bounds = array<i64: 1, 1>, scalar_prefetch = 0 : i64, scratch_operands = 1 : i64, tpu.core_type = #tpu.core_type<tc>, window_params = [{transform_indices = @transform_0, window_bounds = array<i64: 8, 32>}, {transform_indices = @transform_1, window_bounds = array<i64: 8, 1>}, {transform_indices = @transform_2, window_bounds = array<i64: 8, 128>}]} {
    %c0_i32 = arith.constant 0 : i32
    %0 = arith.cmpi eq, %arg1, %c0_i32 : i32
    %1 = arith.extui %0 : i1 to i32
    %c0_i32_0 = arith.constant 0 : i32
    %2 = arith.cmpi ne, %1, %c0_i32_0 : i32
    scf.if %2 {
      %cst_17 = arith.constant 0.000000e+00 : f32
      %37 = vector.broadcast %cst_17 : f32 to vector<1x1xf32>
      %c0_18 = arith.constant 0 : index
      %c0_19 = arith.constant 0 : index
      %38 = vector.load %arg5[%c0_18, %c0_19] : memref<1x1xf32, #tpu.memory_space<vmem>>, vector<1x1xf32>
      tpu.vector_store %arg5[%c0_18, %c0_19], %37 {strides = array<i32>} : memref<1x1xf32, #tpu.memory_space<vmem>>, vector<1x1xf32>,
    } else {
    }
    %c0 = arith.constant 0 : index
    %c0_1 = arith.constant 0 : index
    %3 = vector.load %arg2[%c0, %c0_1] : memref<8x32xf32, #tpu.memory_space<vmem>>, vector<8x32xf32>
    %c0_2 = arith.constant 0 : index
    %c0_3 = arith.constant 0 : index
    %4 = vector.load %arg3[%c0_2, %c0_3] : memref<8x1xi32, #tpu.memory_space<vmem>>, vector<8x1xi32>
    %5 = tpu.iota {dimensions = array<i32: 1>} : vector<8x32xi32>
    %6 = vector.broadcast %4 : vector<8x1xi32> to vector<8x32xi32>
    %7 = arith.cmpi eq, %5, %6 : vector<8x32xi32>
    %cst = arith.constant 0.000000e+00 : f32
    %8 = vector.broadcast %cst : f32 to vector<8x32xf32>
    %9 = arith.select %7, %3, %8 : vector<8x32xi1>, vector<8x32xf32>
    %cst_4 = arith.constant dense<0.000000e+00> : vector<8xf32>
    %10 = vector.multi_reduction <add>, %9, %cst_4 [1] : vector<8x32xf32> to vector<8xf32>
    %11 = vector.shape_cast %10 : vector<8xf32> to vector<8x1xf32>
    %cst_5 = arith.constant 9.99999971E-10 : f32
    %cst_6 = arith.constant 1.000000e+00 : f32
    %12 = vector.broadcast %cst_5 : f32 to vector<8x1xf32>
    %13 = arith.maximumf %12, %11 : vector<8x1xf32>
    %14 = vector.broadcast %cst_6 : f32 to vector<8x1xf32>
    %15 = arith.minimumf %14, %13 : vector<8x1xf32>
    %c1_i32 = arith.constant 1 : i32
    %16 = arith.muli %arg0, %c1_i32 : i32
    %17 = arith.addi %16, %arg1 : i32
    %18 = tpu.iota {dimensions = array<i32: 0>} : vector<8x1xi32>
    %c8_i32 = arith.constant 8 : i32
    %19 = arith.muli %17, %c8_i32 : i32
    %20 = vector.broadcast %19 : i32 to vector<8x1xi32>
    %21 = arith.addi %18, %20 : vector<8x1xi32>
    %c8_i32_7 = arith.constant 8 : i32
    %22 = vector.broadcast %c8_i32_7 : i32 to vector<8x1xi32>
    %23 = arith.cmpi slt, %21, %22 : vector<8x1xi32>
    %24 = math.log %15 : vector<8x1xf32>
    %cst_8 = arith.constant 0.000000e+00 : f32
    %25 = vector.broadcast %cst_8 : f32 to vector<8x1xf32>
    %26 = arith.subf %25, %24 : vector<8x1xf32>
    %cst_9 = arith.constant 0.000000e+00 : f32
    %27 = vector.broadcast %cst_9 : f32 to vector<8x1xf32>
    %28 = arith.select %23, %26, %27 : vector<8x1xi1>, vector<8x1xf32>
    %c0_10 = arith.constant 0 : index
    %c0_11 = arith.constant 0 : index
    %29 = vector.load %arg5[%c0_10, %c0_11] : memref<1x1xf32, #tpu.memory_space<vmem>>, vector<1x1xf32>
    %cst_12 = arith.constant dense<0.000000e+00> : vector<1xf32>
    %30 = vector.multi_reduction <add>, %28, %cst_12 [0] : vector<8x1xf32> to vector<1xf32>
    %31 = vector.shape_cast %30 : vector<1xf32> to vector<1x1xf32>
    %32 = arith.addf %29, %31 : vector<1x1xf32>
    %c0_13 = arith.constant 0 : index
    %c0_14 = arith.constant 0 : index
    %33 = vector.load %arg5[%c0_13, %c0_14] : memref<1x1xf32, #tpu.memory_space<vmem>>, vector<1x1xf32>
    tpu.vector_store %arg5[%c0_13, %c0_14], %32 {strides = array<i32>} : memref<1x1xf32, #tpu.memory_space<vmem>>, vector<1x1xf32>,
    %c0_i32_15 = arith.constant 0 : i32
    %34 = arith.cmpi eq, %arg1, %c0_i32_15 : i32
    %35 = arith.extui %34 : i1 to i32
    %c0_i32_16 = arith.constant 0 : i32
    %36 = arith.cmpi ne, %35, %c0_i32_16 : i32
    scf.if %36 {
      %c0_17 = arith.constant 0 : index
      %c0_18 = arith.constant 0 : index
      %37 = vector.load %arg5[%c0_17, %c0_18] : memref<1x1xf32, #tpu.memory_space<vmem>>, vector<1x1xf32>
      %38 = vector.shape_cast %37 : vector<1x1xf32> to vector<1x1xf32>
      %39 = vector.broadcast %38 : vector<1x1xf32> to vector<8x128xf32>
      %c0_19 = arith.constant 0 : index
      %c0_20 = arith.constant 0 : index
      %40 = vector.load %arg4[%c0_19, %c0_20] : memref<8x128xf32, #tpu.memory_space<vmem>>, vector<8x128xf32>
      tpu.vector_store %arg4[%c0_19, %c0_20], %39 {strides = array<i32>} : memref<8x128xf32, #tpu.memory_space<vmem>>, vector<8x128xf32>,
    } else {
    }
    return
  }
  func.func @transform_0(%arg0: i32, %arg1: i32) -> (i32, i32) {
    %c1_i32 = arith.constant 1 : i32
    %0 = arith.muli %arg0, %c1_i32 : i32
    %1 = arith.addi %0, %arg1 : i32
    %c0_i32 = arith.constant 0 : i32
    %2 = arith.minsi %1, %c0_i32 : i32
    %c0_i32_0 = arith.constant 0 : i32
    %c0_i32_1 = arith.constant 0 : i32
    return %2, %c0_i32_0 : i32, i32
  }
  func.func @transform_1(%arg0: i32, %arg1: i32) -> (i32, i32) {
    %c1_i32 = arith.constant 1 : i32
    %0 = arith.muli %arg0, %c1_i32 : i32
    %1 = arith.addi %0, %arg1 : i32
    %c0_i32 = arith.constant 0 : i32
    %2 = arith.minsi %1, %c0_i32 : i32
    %c0_i32_0 = arith.constant 0 : i32
    %c0_i32_1 = arith.constant 0 : i32
    return %2, %c0_i32_0 : i32, i32
  }
  func.func @transform_2(%arg0: i32, %arg1: i32) -> (i32, i32) {
    %c0_i32 = arith.constant 0 : i32
    %c0_i32_0 = arith.constant 0 : i32
    return %arg0, %c0_i32 : i32, i32
  }
}

</mosaic_0001>

<llo_original>
// kernel: tpu_custom_call.1
$region0: #{tpu_custom_call.1}
  #allocation0 [shape = 'u32[]', space=smem, size = 0x4, offset = 0x4, fixed_abs, tag = 'smem constant byte address 0x4 - core index']
  #allocation1 [shape = 'u32[144,128]{1,0:T(1,128)}', space=vmem, size = 0x12000, scoped, tag = 'internal scratch']
  #allocation2 [shape = 'f32[1,1]{1,0:T(1,128)}', space=vmem, size = 0x200, scoped, tag = 'scratch operand']
  %s0 = inlined_call_operand.vmem [shape: f32[8,32], index: 0, kind: input, shape index: {}]
  %s1 = inlined_call_operand.vmem [shape: s32[8,1], index: 1, kind: input, shape index: {}]
  %s2 = inlined_call_operand.hbm [shape: f32[8,128], index: 2, kind: output, shape index: {}]
  %s3 = sld [smem:[#allocation0]]
  $region26: #{tpu_custom_call.1} parent=0
    _
  %s5 = ssub.s32 1, %s3
  %s6 = scalar_select 0, %s5, %s3
  $region1: #{tpu_custom_call.1} parent=0
    #allocation3 [shape = 'u8[4096]{0}', space=vmem, size = 0x1000, scoped, tag = 'output window, operand 0, single buffered']
    #allocation4 [shape = 's32[1]{0}', space=sflag, size = 0x4, scoped, tag = 'scoped memory for tpu_custom_call.1']
    %7 = vsyncpa [#allocation4], 0
    // Predicated region
    $region2: #{tpu_custom_call.1} parent=1 // pred_check
      _
    $region3: #{tpu_custom_call.1} parent=1 // pred_check_branch
      %9 = sbr.rel (0) target = $region5
    $region4: #{tpu_custom_call.1} parent=1 // pred_region
      %s10 = sadd.s32 0, 0
      %p11 = scmp.lt.s32.totalorder %s10, 0
      %s12 = scalar_select %p11, %s10, 0
      %p13 = scmp.lt.s32.totalorder %s12, 0
      %s14 = scalar_select %p13, %s12, 0
      %s15 = smul.addr %s14, 8
      %s16 = scalar_lea.vmem %s0, %s15
      %s17 = sadd.s32 0, 0
      %p18 = scmp.lt.s32.totalorder %s17, 0
      %s19 = scalar_select %p18, %s17, 0
    $region5: #{tpu_custom_call.1} parent=1 // pred_fallthru
      _
    // Predicated region
    $region6: #{tpu_custom_call.1} parent=1 // pred_check
      _
    $region7: #{tpu_custom_call.1} parent=1 // pred_check_branch
      %21 = sbr.rel (0) target = $region9
    $region8: #{tpu_custom_call.1} parent=1 // pred_region
      %s22 = sadd.s32 0, 0
      %p23 = scmp.lt.s32.totalorder %s22, 0
      %s24 = scalar_select %p23, %s22, 0
      %p25 = scmp.lt.s32.totalorder %s24, 0
      %s26 = scalar_select %p25, %s24, 0
      %s27 = smul.addr %s26, 8
      %s28 = scalar_lea.vmem %s1, %s27
      %s29 = sadd.s32 0, 0
      %p30 = scmp.lt.s32.totalorder %s29, 0
      %s31 = scalar_select %p30, %s29, 0
    $region9: #{tpu_custom_call.1} parent=1 // pred_fallthru
      _
    %s32 = sadd.s32 0, 0
    %p33 = scmp.lt.s32.totalorder %s32, 0
    %s34 = scalar_select %p33, %s32, 0
    %p35 = scmp.lt.s32.totalorder %s34, 0
    %s36 = scalar_select %p35, %s34, 0
    %s37 = smul.addr %s36, 8
    %s38 = scalar_lea.vmem %s0, %s37
    %s39 = sadd.s32 0, 0
    %p40 = scmp.lt.s32.totalorder %s39, 0
    %s41 = scalar_select %p40, %s39, 0
    %p42 = scmp.lt.s32.totalorder %s41, 0
    %s43 = scalar_select %p42, %s41, 0
    %s44 = smul.addr %s43, 8
    %s45 = scalar_lea.vmem %s1, %s44
    %s46 = sadd.s32 0, 0
    %p47 = scmp.lt.s32.totalorder %s46, 0
    %s48 = scalar_select %p47, %s46, 0
    %p49 = scmp.lt.s32.totalorder %s48, 0
    %s50 = scalar_select %p49, %s48, 0
    %s51 = smul.addr %s50, 8
    %s52 = scalar_lea.vmem %s0, %s51
    %s53 = sadd.s32 0, 0
    %p54 = scmp.lt.s32.totalorder %s53, 0
    %s55 = scalar_select %p54, %s53, 0
    %s56 = sadd.s32 0, 0
    %p57 = scmp.lt.s32.totalorder %s56, 0
    %s58 = scalar_select %p57, %s56, 0
    %p59 = scmp.lt.s32.totalorder %s58, 0
    %s60 = scalar_select %p59, %s58, 0
    %s61 = smul.addr %s60, 8
    %s62 = scalar_lea.vmem %s1, %s61
    %s63 = sadd.s32 0, 0
    %p64 = scmp.lt.s32.totalorder %s63, 0
    %s65 = scalar_select %p64, %s63, 0
    %p66 = scmp.eq.s32.totalorder 0, 0
    // Predicated region
    $region10: #{tpu_custom_call.1} parent=1 // pred_check
      %p67 = pneg %p66
    $region11: #{tpu_custom_call.1} parent=1 // pred_check_branch
      %69 = sbr.rel (%p67) target = $region13
    $region12: #{tpu_custom_call.1} parent=1 // pred_region
      %vm70 = vcmask 0
      %71 = vst.msk [vmem:[#allocation2] sm:$0x1] %vm70, 0.0
    $region13: #{tpu_custom_call.1} parent=1 // pred_fallthru
      _
    %v72 = vld [vmem:[%s52] sm:$0xff]
    %v73 = vld [vmem:[%s62] sm:$0xff]
    %v74 = vlaneseq
    %v75 = vand.u32 %v74, 127
    %76 = vset.pattern.permute.xlu0 0
    %77 = vperm.xlu0 %76, %v73
    %v78 = vpop.permute.xlu0 %77
    %vm79 = vcmp.eq.s32.totalorder %v75, %v78
    %v80 = vsel %vm79, %v72, 0.0
    %vm81 = vcmask 261120
    %v82 = vsel %vm81, %v80, 0.0
    %83 = vadd.xlane.f32.xlu0 %v82
    %v84 = vpop.xlane.xlu0 %83
    %v85 = vmax.f32 %v84, 1e-09
    %v86 = vmin.f32 %v85, 1.0
    %s87 = sadd.s32 0, 0
    %v88 = vlaneseq
    %v89 = vshrl.u32 %v88, 7
    %s90 = smul.u32 %s87, 8
    %v91 = vstv %s90
    %v92 = vadd.s32 %v89, %v91
    %vm93 = vcmp.lt.s32.totalorder %v92, 8
    %v94 = vlog2.pop %v86
    %v95 = vmul.f32 %v94, 0.6931472
    %v96 = vsub.f32 0.0, %v95
    %v97 = vsel %vm93, %v96, 0.0
    %v98 = vld [vmem:[#allocation2] sm:$0x1]
    %v99 = vrot.slane %v97, 4
    %v100 = vadd.f32 %v97, %v99
    %v101 = vrot.slane %v100, 2
    %v102 = vadd.f32 %v100, %v101
    %v103 = vrot.slane %v102, 1
    %v104 = vadd.f32 %v102, %v103
    %v105 = vadd.f32 %v98, %v104
    %vm106 = vcmask 0
    %107 = vst.msk [vmem:[#allocation2] sm:$0x1] %vm106, %v105
    // Predicated region
    $region14: #{tpu_custom_call.1} parent=1 // pred_check
      %p108 = pneg %p66
    $region15: #{tpu_custom_call.1} parent=1 // pred_check_branch
      %110 = sbr.rel (%p108) target = $region17
    $region16: #{tpu_custom_call.1} parent=1 // pred_region
      %v111 = vld [vmem:[#allocation2] sm:$0x1]
      %v113 = vlaneseq
      %v114 = vshrl.u32 %v113, 7
      %v115 = vsub.s32 0, %v114
      %v116 = vrot.slane %v111, %v115
      %117 = vset.pattern.permute.xlu0 0
      %118 = vperm.xlu0 %117, %v116
      %v119 = vpop.permute.xlu0 %118
      %121 = vst [vmem:[#allocation3] sm:$0xff] %v119
    $region17: #{tpu_custom_call.1} parent=1 // pred_fallthru
      _
    // Predicated region
    $region18: #{tpu_custom_call.1} parent=1 // pred_check
      _
    $region19: #{tpu_custom_call.1} parent=1 // pred_check_branch
      %123 = sbr.rel (0) target = $region21
    $region20: #{tpu_custom_call.1} parent=1 // pred_region
      %s125 = ssub.s32 128, 128
      %126 = vsyncadd [#allocation4], %s125
      %s128 = sshll.u32 [#allocation3], 4
      %s129 = int_to_ptr.vmem [resolvable:$true] %s128
      %131 = dma.vmem_to_hbm [thread:$0]  %s129, 128, %s2, [#allocation4]
    $region21: #{tpu_custom_call.1} parent=1 // pred_fallthru
      _
    // Predicated region
    $region22: #{tpu_custom_call.1} parent=1 // pred_check
      _
    $region23: #{tpu_custom_call.1} parent=1 // pred_check_branch
      %133 = sbr.rel (0) target = $region25
    $region24: #{tpu_custom_call.1} parent=1 // pred_region
      %134 = dma.done [#allocation4], 128
    $region25: #{tpu_custom_call.1} parent=1 // pred_fallthru
      _
    %135 = vsyncpa [#allocation4], 1

</llo_original>
